<compile_context>
chip_gen: v7x
topology: tpu7x:2x2x1
jax: 0.10.0
libtpu: 0.0.40
codegen_flags: <defaults>
</compile_context>

<pallas_src>
import numpy as np
import jax
import jax.numpy as jnp
from jax.experimental import pallas as pl
from jax.experimental.pallas import tpu as pltpu


def _round_up(x, m):
    return ((x + m - 1) // m) * m


def _cdiv(a, b):
    return (a + b - 1) // b


# ----------------------------------------------------------------------------
# Pallas kernel (channels on sublanes, pixels on lanes)
#   a   = relu(Wg^T @ g + Wx^T @ x + (bg + bx))   (F_int, tM)  f32
#   psi = sigmoid(sum_c a_c * wp_c + bp)          (1, tM)      f32 (VPU + XLU)
#   out = x * psi                                 (F_l, tM)
# ----------------------------------------------------------------------------
def attention_block_kernel(g_ref, x_ref, wgt_ref, wxt_ref, bgx_ref, wp_ref,
                           bp_ref, o_ref):
    # g_ref: (F_g, tM), x_ref: (F_l, tM)           activation dtype
    # wgt_ref: (F_int, F_g), wxt_ref: (F_int, F_l) activation dtype
    # bgx_ref: (F_int, 1) f32, wp_ref: (F_int, 1) f32
    # bp_ref: (1,) f32 scalar in SMEM
    # Single fused expression: the compiler keeps g1/x1 as MXU-result consumers
    # instead of materializing three separate (F_int, tM) f32 temps.
    a = jnp.maximum(
        jnp.dot(wgt_ref[...], g_ref[...], preferred_element_type=jnp.float32)
        + jnp.dot(wxt_ref[...], x_ref[...], preferred_element_type=jnp.float32)
        + bgx_ref[...],
        0.0)                                                  # (F_int, tM) f32

    # Output-width-1 "matmul" as VPU multiply + cross-sublane reduce; result is
    # already lane-dense and the MXU stays free.
    logit = jnp.sum(a * wp_ref[...], axis=0, keepdims=True) + bp_ref[0]
    psi = jax.nn.sigmoid(logit)                               # (1, tM) f32

    # Gating multiply in the activation dtype (bf16 VALU on v6e/v7x when the
    # caller feeds bf16; f32 path otherwise — v5e has no bf16 VALU anyway).
    xv = x_ref[...]
    o_ref[...] = (xv * psi.astype(xv.dtype)).astype(o_ref.dtype)


# ----------------------------------------------------------------------------
# Tile-size / VMEM budgeting
# ----------------------------------------------------------------------------
def _vmem_capacity_bytes():
    try:
        return int(pltpu.get_tpu_info().vmem_capacity_bytes)
    except Exception:
        return 64 * 1024 * 1024  # conservative (v7x per-TC) fallback


def _vmem_estimate(tm, F_g, F_l, F_int, in_bytes, out_bytes):
    """Conservative VMEM footprint for one pipelined grid step."""
    # double-buffered activation input/output tiles
    act = 2 * tm * ((F_g + F_l) * in_bytes + F_l * out_bytes)
    # f32 intermediates the compiler may materialize (matmul results, a) + psi
    interm = 3 * _round_up(max(F_int, 1), 8) * tm * 4 + tm * 4
    # double-buffered weight blocks + bias / psi-weight columns (lane-padded)
    w = 2 * _round_up(max(F_int, 1), 8) * (
        _round_up(max(F_g, 1), 128) + _round_up(max(F_l, 1), 128)) * in_bytes
    cols = 4 * 8 * 128 * 4
    return act + interm + w + cols


def _choose_tm(HW, N, F_g, F_l, F_int, in_bytes, out_bytes, vmem_budget,
               tm_req=None):
    if tm_req is not None:
        tm = _round_up(max(tm_req, 128), 128)
    else:
        # Target >= ~2 MiB of HBM traffic per grid step.
        per_px = (F_g + F_l) * in_bytes + F_l * out_bytes
        tm = _round_up(max(1, (2 * 1024 * 1024) // max(per_px, 1)), 128)
        tm = max(512, min(tm, 4096))
    tm = min(tm, _round_up(HW, 128))
    tm = max(tm, 128)
    # v7x has 2 TensorCores sharded over the "parallel" grid axes: when N == 1,
    # keep at least 2 pixel tiles so one core isn't idle.
    if N == 1 and HW > 128:
        while tm > 128 and _cdiv(HW, tm) < 2:
            tm -= 128
    # Shrink until the VMEM estimate fits the budget.
    while tm > 128 and _vmem_estimate(tm, F_g, F_l, F_int, in_bytes,
                                      out_bytes) > vmem_budget:
        tm -= 128
    return tm


# ----------------------------------------------------------------------------
# pallas_call wrapper
# ----------------------------------------------------------------------------
def attention_block_pallas(g3, x3, wg_t, wx_t, b_gx, wp_col, bp, *,
                           out_dtype, tm, vmem_limit):
    """g3: (N, F_g, HW), x3: (N, F_l, HW); HW need not divide tm (edge masked)."""
    N, F_g, HW = g3.shape
    _, F_l, _ = x3.shape
    F_int = wg_t.shape[0]
    assert tm % 128 == 0

    grid = (N, _cdiv(HW, tm))  # 2-D, both parallel -> shards across v7x's 2 TCs

    return pl.pallas_call(
        attention_block_kernel,
        out_shape=jax.ShapeDtypeStruct((N, F_l, HW), out_dtype),
        grid_spec=pltpu.PrefetchScalarGridSpec(
            num_scalar_prefetch=0,
            grid=grid,
            in_specs=[
                # activations: batch dim squeezed, channels x pixel-tile blocks;
                # the last pixel tile may be ragged (Pallas masks edge stores).
                pl.BlockSpec((pl.Squeezed(), F_g, tm), lambda n, i: (n, 0, i)),
                pl.BlockSpec((pl.Squeezed(), F_l, tm), lambda n, i: (n, 0, i)),
                # folded-BN conv weights (transposed for pixels-on-lane layout)
                pl.BlockSpec((F_int, F_g), lambda n, i: (0, 0)),
                pl.BlockSpec((F_int, F_l), lambda n, i: (0, 0)),
                # fused bias column (bg + bx) and psi weight column, f32
                pl.BlockSpec((F_int, 1), lambda n, i: (0, 0)),
                pl.BlockSpec((F_int, 1), lambda n, i: (0, 0)),
                # psi bias scalar lives in SMEM (no wasted (8,128) VMEM tile)
                pl.BlockSpec(memory_space=pltpu.MemorySpace.SMEM),
            ],
            out_specs=pl.BlockSpec((pl.Squeezed(), F_l, tm),
                                   lambda n, i: (n, 0, i)),
        ),
        compiler_params=pltpu.CompilerParams(
            dimension_semantics=("parallel", "parallel"),
            vmem_limit_bytes=vmem_limit),
    )(g3, x3, wg_t, wx_t, b_gx, wp_col, bp)


# ----------------------------------------------------------------------------
# BN folding + parameter construction (plain-JAX glue)
# ----------------------------------------------------------------------------
def fold_conv_bn(w, b, gamma, beta, mean, var, eps=1e-5):
    """Fold eval-mode BatchNorm into a 1x1 conv expressed as (Cin, Cout) matmul."""
    s = gamma / jnp.sqrt(var + eps)          # (Cout,)
    w_eff = w * s[None, :]                   # (Cin, Cout)
    b_eff = (b - mean) * s + beta            # (Cout,)
    return w_eff, b_eff


def make_params(key, F_g, F_l, F_int):
    ks = jax.random.split(key, 12)
    p = {}
    # W_g branch: Conv2d(F_g, F_int, 1) + BN(F_int)
    p["wg"] = jax.random.normal(ks[0], (F_g, F_int), jnp.float32) * 0.1
    p["bg"] = jax.random.normal(ks[1], (F_int,), jnp.float32) * 0.1
    p["g_gamma"] = 1.0 + 0.1 * jax.random.normal(ks[2], (F_int,), jnp.float32)
    p["g_beta"] = 0.1 * jax.random.normal(ks[3], (F_int,), jnp.float32)
    p["g_mean"] = 0.05 * jax.random.normal(ks[4], (F_int,), jnp.float32)
    p["g_var"] = 0.5 + jax.random.uniform(ks[5], (F_int,), jnp.float32)
    # W_x branch: Conv2d(F_l, F_int, 1) + BN(F_int)
    p["wx"] = jax.random.normal(ks[6], (F_l, F_int), jnp.float32) * 0.1
    p["bx"] = jax.random.normal(ks[7], (F_int,), jnp.float32) * 0.1
    p["x_gamma"] = 1.0 + 0.1 * jax.random.normal(ks[8], (F_int,), jnp.float32)
    p["x_beta"] = 0.1 * jax.random.normal(ks[9], (F_int,), jnp.float32)
    p["x_mean"] = 0.05 * jax.random.normal(ks[10], (F_int,), jnp.float32)
    p["x_var"] = 0.5 + jax.random.uniform(ks[11], (F_int,), jnp.float32)
    # psi branch: Conv2d(F_int, 1, 1) + BN(1) + Sigmoid
    kp = jax.random.split(jax.random.fold_in(key, 7), 6)
    p["wp"] = jax.random.normal(kp[0], (F_int, 1), jnp.float32) * 0.1
    p["bp"] = jax.random.normal(kp[1], (1,), jnp.float32) * 0.1
    p["p_gamma"] = 1.0 + 0.1 * jax.random.normal(kp[2], (1,), jnp.float32)
    p["p_beta"] = 0.1 * jax.random.normal(kp[3], (1,), jnp.float32)
    p["p_mean"] = 0.05 * jax.random.normal(kp[4], (1,), jnp.float32)
    p["p_var"] = 0.5 + jax.random.uniform(kp[5], (1,), jnp.float32)
    return p


def _folded_weights(params):
    wg, bg = fold_conv_bn(params["wg"], params["bg"], params["g_gamma"],
                          params["g_beta"], params["g_mean"], params["g_var"])
    wx, bx = fold_conv_bn(params["wx"], params["bx"], params["x_gamma"],
                          params["x_beta"], params["x_mean"], params["x_var"])
    wp, bp = fold_conv_bn(params["wp"], params["bp"], params["p_gamma"],
                          params["p_beta"], params["p_mean"], params["p_var"])
    return wg, bg, wx, bx, wp, bp


def attention_block(g_nchw, x_nchw, params, *, out_dtype=None, tm=None):
    """Full module forward. g: (N, F_g, H, W), x: (N, F_l, H, W) -> (N, F_l, H, W).

    Inputs are consumed in their native dtype (no wrapper cast pass); feed bf16
    from the upstream layer to halve HBM read bytes.  Pass out_dtype=jnp.bfloat16
    when the downstream decoder concat tolerates it to also halve write bytes.
    """
    N, F_g, H, W = g_nchw.shape
    _, F_l, _, _ = x_nchw.shape
    HW = H * W

    act_dtype = x_nchw.dtype
    out_dtype = act_dtype if out_dtype is None else out_dtype

    wg, bg, wx, bx, wp, bp = _folded_weights(params)
    F_int = wg.shape[1]

    # Transposed (Cout, Cin) weights for the channels-on-sublane layout; weights
    # are tiny, so casting them to the activation dtype is negligible.
    wg_t = wg.T.astype(act_dtype)                            # (F_int, F_g)
    wx_t = wx.T.astype(act_dtype)                            # (F_int, F_l)
    b_gx = (bg + bx).reshape(F_int, 1).astype(jnp.float32)   # fused biases
    wp_col = wp.reshape(F_int, 1).astype(jnp.float32)
    bp_s = bp.reshape(1).astype(jnp.float32)

    # NCHW -> (N, C, H*W): pure reshape — no transpose, no cast, no pad, so the
    # only HBM traffic is the kernel's own read/compute/write pass.
    g3 = g_nchw.reshape(N, F_g, HW)
    x3 = x_nchw.reshape(N, F_l, HW)

    in_bytes = jnp.dtype(act_dtype).itemsize
    out_bytes = jnp.dtype(out_dtype).itemsize

    # VMEM budget: ~80% of queried physical capacity (~51 MiB on v7x,
    # ~102 MiB on v5e/v6e); tile size shrinks to fit.
    vmem_budget = int(0.8 * _vmem_capacity_bytes())
    tm_eff = _choose_tm(HW, N, F_g, F_l, F_int, in_bytes, out_bytes,
                        vmem_budget, tm_req=tm)
    est = _vmem_estimate(tm_eff, F_g, F_l, F_int, in_bytes, out_bytes)
    vmem_limit = int(min(vmem_budget, max(32 * 1024 * 1024, int(1.5 * est))))

    # TODO(synk): optional pipeline_mode=pl.Buffered(3) on the activation inputs
    # for small-channel configs on v5e/v6e (ample VMEM) if DMA latency shows up.
    out3 = attention_block_pallas(g3, x3, wg_t, wx_t, b_gx, wp_col, bp_s,
                                  out_dtype=out_dtype, tm=tm_eff,
                                  vmem_limit=vmem_limit)
    return out3.reshape(N, F_l, H, W)


def attention_block_reference(g_nchw, x_nchw, params):
    """Pure-JAX NCHW reference (eval-mode BN folded, f32 math)."""
    wg, bg, wx, bx, wp, bp = _folded_weights(params)
    g = g_nchw.astype(jnp.float32)
    x = x_nchw.astype(jnp.float32)
    g1 = jnp.einsum("nchw,cd->ndhw", g, wg,
                    precision=jax.lax.Precision.HIGHEST) + bg[None, :, None, None]
    x1 = jnp.einsum("nchw,cd->ndhw", x, wx,
                    precision=jax.lax.Precision.HIGHEST) + bx[None, :, None, None]
    a = jnp.maximum(g1 + x1, 0.0)
    logit = jnp.einsum("ndhw,d->nhw", a, wp[:, 0],
                       precision=jax.lax.Precision.HIGHEST)[:, None, :, :] + bp[0]
    psi = jax.nn.sigmoid(logit)
    return x * psi


if __name__ == "__main__":
    key = jax.random.PRNGKey(0)
    k_g, k_x, k_p = jax.random.split(key, 3)

    N, F_g, F_l, F_int, H, W = 2, 8, 4, 16, 16, 16
    g = jax.random.normal(k_g, (N, F_g, H, W), jnp.float32)
    x = jax.random.normal(k_x, (N, F_l, H, W), jnp.float32)
    params = make_params(k_p, F_g, F_l, F_int)

    out = jax.block_until_ready(attention_block(g, x, params))
    assert out.shape == (N, F_l, H, W)
    assert out.dtype == jnp.float32

    ref = jax.block_until_ready(attention_block_reference(g, x, params))
    np.testing.assert_allclose(np.asarray(out), np.asarray(ref),
                               rtol=2e-2, atol=2e-2)

    print("KERNEL_OK")
</pallas_src>

<mosaic_0001>
module attributes {stable_mosaic.version = 11 : i64} {
  func.func @attention_block_kernel(%arg0: i32, %arg1: i32, %arg2: memref<1x8x256xf32, #tpu.memory_space<vmem>>, %arg3: memref<1x4x256xf32, #tpu.memory_space<vmem>>, %arg4: memref<16x8xf32, #tpu.memory_space<vmem>>, %arg5: memref<16x4xf32, #tpu.memory_space<vmem>>, %arg6: memref<16x1xf32, #tpu.memory_space<vmem>>, %arg7: memref<16x1xf32, #tpu.memory_space<vmem>>, %arg8: memref<1xf32, #tpu.memory_space<smem>>, %arg9: memref<1x4x256xf32, #tpu.memory_space<vmem>>) attributes {dimension_semantics = [#tpu.dimension_semantics<parallel>, #tpu.dimension_semantics<parallel>], iteration_bounds = array<i64: 2, 1>, scalar_prefetch = 0 : i64, scratch_operands = 0 : i64, tpu.core_type = #tpu.core_type<tc>, window_params = [{transform_indices = @transform_0, window_bounds = array<i64: 1, 8, 256>}, {transform_indices = @transform_1, window_bounds = array<i64: 1, 4, 256>}, {pipeline_mode = #tpu.pipeline_mode<synchronous>, transform_indices = @transform_2, window_bounds = array<i64: 16, 8>}, {pipeline_mode = #tpu.pipeline_mode<synchronous>, transform_indices = @transform_3, window_bounds = array<i64: 16, 4>}, {pipeline_mode = #tpu.pipeline_mode<synchronous>, transform_indices = @transform_4, window_bounds = array<i64: 16, 1>}, {pipeline_mode = #tpu.pipeline_mode<synchronous>, transform_indices = @transform_5, window_bounds = array<i64: 16, 1>}, {transform_indices = @transform_6, window_bounds = array<i64: 1>}, {transform_indices = @transform_7, window_bounds = array<i64: 1, 4, 256>}]} {
    %c0 = arith.constant 0 : index
    %c0_0 = arith.constant 0 : index
    %0 = vector.load %arg4[%c0, %c0_0] : memref<16x8xf32, #tpu.memory_space<vmem>>, vector<16x8xf32>
    %c0_1 = arith.constant 0 : index
    %c0_2 = arith.constant 0 : index
    %c0_3 = arith.constant 0 : index
    %1 = vector.load %arg2[%c0_1, %c0_2, %c0_3] : memref<1x8x256xf32, #tpu.memory_space<vmem>>, vector<1x8x256xf32>
    %2 = vector.shape_cast %1 : vector<1x8x256xf32> to vector<8x256xf32>
    %cst = arith.constant dense<0.000000e+00> : vector<16x256xf32>
    %3 = tpu.matmul %0, %2, %cst {dimension_numbers = #tpu.dot_dimension_numbers<[1], [0], [0], [1], [0, 0, 1, 1], [], []>} : vector<16x8xf32>, vector<8x256xf32>, vector<16x256xf32> -> vector<16x256xf32>
    %c0_4 = arith.constant 0 : index
    %c0_5 = arith.constant 0 : index
    %4 = vector.load %arg5[%c0_4, %c0_5] : memref<16x4xf32, #tpu.memory_space<vmem>>, vector<16x4xf32>
    %c0_6 = arith.constant 0 : index
    %c0_7 = arith.constant 0 : index
    %c0_8 = arith.constant 0 : index
    %5 = vector.load %arg3[%c0_6, %c0_7, %c0_8] : memref<1x4x256xf32, #tpu.memory_space<vmem>>, vector<1x4x256xf32>
    %6 = vector.shape_cast %5 : vector<1x4x256xf32> to vector<4x256xf32>
    %cst_9 = arith.constant dense<0.000000e+00> : vector<16x256xf32>
    %7 = tpu.matmul %4, %6, %cst_9 {dimension_numbers = #tpu.dot_dimension_numbers<[1], [0], [0], [1], [0, 0, 1, 1], [], []>} : vector<16x4xf32>, vector<4x256xf32>, vector<16x256xf32> -> vector<16x256xf32>
    %8 = arith.addf %3, %7 : vector<16x256xf32>
    %c0_10 = arith.constant 0 : index
    %c0_11 = arith.constant 0 : index
    %9 = vector.load %arg6[%c0_10, %c0_11] : memref<16x1xf32, #tpu.memory_space<vmem>>, vector<16x1xf32>
    %10 = vector.broadcast %9 : vector<16x1xf32> to vector<16x256xf32>
    %11 = arith.addf %8, %10 : vector<16x256xf32>
    %cst_12 = arith.constant 0.000000e+00 : f32
    %12 = vector.broadcast %cst_12 : f32 to vector<16x256xf32>
    %13 = arith.maximumf %11, %12 : vector<16x256xf32>
    %c0_13 = arith.constant 0 : index
    %c0_14 = arith.constant 0 : index
    %14 = vector.load %arg7[%c0_13, %c0_14] : memref<16x1xf32, #tpu.memory_space<vmem>>, vector<16x1xf32>
    %15 = vector.broadcast %14 : vector<16x1xf32> to vector<16x256xf32>
    %16 = arith.mulf %13, %15 : vector<16x256xf32>
    %cst_15 = arith.constant dense<0.000000e+00> : vector<256xf32>
    %17 = vector.multi_reduction <add>, %16, %cst_15 [0] : vector<16x256xf32> to vector<256xf32>
    %18 = vector.shape_cast %17 : vector<256xf32> to vector<1x256xf32>
    %c0_16 = arith.constant 0 : index
    %19 = memref.load %arg8[%c0_16] : memref<1xf32, #tpu.memory_space<smem>>
    %20 = vector.broadcast %19 : f32 to vector<1x256xf32>
    %21 = arith.addf %18, %20 : vector<1x256xf32>
    %22 = arith.negf %21 : vector<1x256xf32>
    %23 = math.exp %22 : vector<1x256xf32>
    %cst_17 = arith.constant 1.000000e+00 : f32
    %24 = vector.broadcast %cst_17 : f32 to vector<1x256xf32>
    %25 = arith.addf %24, %23 : vector<1x256xf32>
    %26 = arith.divf %24, %25 : vector<1x256xf32>
    %c0_18 = arith.constant 0 : index
    %c0_19 = arith.constant 0 : index
    %c0_20 = arith.constant 0 : index
    %27 = vector.load %arg3[%c0_18, %c0_19, %c0_20] : memref<1x4x256xf32, #tpu.memory_space<vmem>>, vector<1x4x256xf32>
    %28 = vector.shape_cast %27 : vector<1x4x256xf32> to vector<4x256xf32>
    %29 = vector.broadcast %26 : vector<1x256xf32> to vector<4x256xf32>
    %30 = arith.mulf %28, %29 : vector<4x256xf32>
    %c0_21 = arith.constant 0 : index
    %c0_22 = arith.constant 0 : index
    %c0_23 = arith.constant 0 : index
    %31 = vector.load %arg9[%c0_21, %c0_22, %c0_23] : memref<1x4x256xf32, #tpu.memory_space<vmem>>, vector<1x4x256xf32>
    %32 = vector.shape_cast %31 : vector<1x4x256xf32> to vector<4x256xf32>
    %33 = vector.shape_cast %30 : vector<4x256xf32> to vector<1x4x256xf32>
    tpu.vector_store %arg9[%c0_21, %c0_22, %c0_23], %33 {strides = array<i32>} : memref<1x4x256xf32, #tpu.memory_space<vmem>>, vector<1x4x256xf32>,
    return
  }
  func.func @transform_0(%arg0: i32, %arg1: i32) -> (i32, i32, i32) {
    %c0_i32 = arith.constant 0 : i32
    %c0_i32_0 = arith.constant 0 : i32
    return %arg0, %c0_i32, %arg1 : i32, i32, i32
  }
  func.func @transform_1(%arg0: i32, %arg1: i32) -> (i32, i32, i32) {
    %c0_i32 = arith.constant 0 : i32
    %c0_i32_0 = arith.constant 0 : i32
    return %arg0, %c0_i32, %arg1 : i32, i32, i32
  }
  func.func @transform_2(%arg0: i32, %arg1: i32) -> (i32, i32) {
    %c0_i32 = arith.constant 0 : i32
    %c0_i32_0 = arith.constant 0 : i32
    %c0_i32_1 = arith.constant 0 : i32
    return %c0_i32, %c0_i32_0 : i32, i32
  }
  func.func @transform_3(%arg0: i32, %arg1: i32) -> (i32, i32) {
    %c0_i32 = arith.constant 0 : i32
    %c0_i32_0 = arith.constant 0 : i32
    %c0_i32_1 = arith.constant 0 : i32
    return %c0_i32, %c0_i32_0 : i32, i32
  }
  func.func @transform_4(%arg0: i32, %arg1: i32) -> (i32, i32) {
    %c0_i32 = arith.constant 0 : i32
    %c0_i32_0 = arith.constant 0 : i32
    %c0_i32_1 = arith.constant 0 : i32
    return %c0_i32, %c0_i32_0 : i32, i32
  }
  func.func @transform_5(%arg0: i32, %arg1: i32) -> (i32, i32) {
    %c0_i32 = arith.constant 0 : i32
    %c0_i32_0 = arith.constant 0 : i32
    %c0_i32_1 = arith.constant 0 : i32
    return %c0_i32, %c0_i32_0 : i32, i32
  }
  func.func @transform_6(%arg0: i32, %arg1: i32) -> i32 {
    %c0_i32 = arith.constant 0 : i32
    %c0_i32_0 = arith.constant 0 : i32
    return %c0_i32 : i32
  }
  func.func @transform_7(%arg0: i32, %arg1: i32) -> (i32, i32, i32) {
    %c0_i32 = arith.constant 0 : i32
    %c0_i32_0 = arith.constant 0 : i32
    return %arg0, %c0_i32, %arg1 : i32, i32, i32
  }
}

</mosaic_0001>

<llo_original>
// kernel: tpu_custom_call.1
$region0: #{tpu_custom_call.1}
  #allocation0 [shape = 'u32[]', space=smem, size = 0x4, offset = 0x4, fixed_abs, tag = 'smem constant byte address 0x4 - core index']
  #allocation1 [shape = 'u32[144,128]{1,0:T(1,128)}', space=vmem, size = 0x12000, scoped, tag = 'internal scratch']
  #allocation2 [shape = 'f32[1]{0:T(128)S(6)}', space=smem, size = 0x200, scoped, tag = 'scoped memory for tpu_custom_call.1']
  %s0 = inlined_call_operand.vmem [shape: f32[2,8,256], index: 0, kind: input, shape index: {}]
  %s1 = inlined_call_operand.vmem [shape: f32[2,4,256], index: 1, kind: input, shape index: {}]
  %s2 = inlined_call_operand.vmem [shape: f32[16,8], index: 2, kind: input, shape index: {}]
  %s3 = inlined_call_operand.vmem [shape: f32[16,4], index: 3, kind: input, shape index: {}]
  %s4 = inlined_call_operand.vmem [shape: f32[16,1], index: 4, kind: input, shape index: {}]
  %s5 = inlined_call_operand.vmem [shape: f32[16,1], index: 5, kind: input, shape index: {}]
  %s6 = inlined_call_operand.<no memory space> [shape: f32[1], index: 6, kind: input, shape index: {}]
  %s7 = inlined_call_operand.hbm [shape: f32[2,4,256], index: 7, kind: output, shape index: {}]
  %s8 = sld [smem:[#allocation0]]
  $region61: #{tpu_custom_call.1} parent=0
    _
  %s10 = ssub.s32 1, %s8
  %s11 = scalar_select 0, %s10, %s8
  %12 = sst [smem:[#allocation2]] %s6
  $region1: #{tpu_custom_call.1} parent=0
    #allocation3 [shape = 'u8[8192]{0}', space=vmem, size = 0x2000, scoped, tag = 'output window, operand 0']
    #allocation4 [shape = 's32[2]{0}', space=sflag, size = 0x8, scoped, tag = 'scoped memory for tpu_custom_call.1']
    %13 = vsyncpa [#allocation4], 0
    %s14 = scalar_lea.sflag [#allocation4], 1
    %15 = vsyncpa %s14, 0
    loop: start=0, step=1, limit=4
    $region2: #{tpu_custom_call.1} parent=1 // loop_pre_header
      _
    $region3: #{tpu_custom_call.1} parent=1 // loop_header
      %s17 = sphi 0, %s21
      %p18 = scmp.ge.s32.totalorder %s17, 4
      %s24 = sphi 0, %s36
      %s25 = sphi 0, %s32
      %s26 = sphi 0, %s24
      %s27 = sphi 0, %s25
      %s28 = sphi 0, %s26
      %s29 = sphi 0, %s27
      %s41 = sphi 0, %s43
      %s44 = sphi 0, %s41
      %s45 = sphi 0, %s44
      %s61 = sphi 0, %s45
      %s69 = sphi 0, %s71
      %s72 = sphi 0, %s69
      %s73 = sphi 0, %s72
      %s89 = sphi 0, %s73
      %s93 = sphi 0, %s93
      %s95 = sphi 0, %s93
      %s96 = sphi 0, %s95
      %s110 = sphi 0, %s96
      %s114 = sphi 0, %s114
      %s116 = sphi 0, %s114
      %s117 = sphi 0, %s116
      %s131 = sphi 0, %s117
      %s135 = sphi 0, %s135
      %s137 = sphi 0, %s135
      %s138 = sphi 0, %s137
      %s152 = sphi 0, %s138
      %s156 = sphi 0, %s156
      %s158 = sphi 0, %s156
      %s159 = sphi 0, %s158
      %s173 = sphi 0, %s159
      %s177 = sphi 0, %s177
      %s179 = sphi 0, %s177
      %s180 = sphi 0, %s179
      %s194 = sphi 0, %s180
      %s202 = sphi 0, %s204
      %s205 = sphi 0, %s202
      %s206 = sphi 0, %s205
      %s222 = sphi 0, %s206
    $region4: #{tpu_custom_call.1} parent=1 // loop_header_branch
      %20 = sbr.rel (%p18) target = $region8
    $region5: #{tpu_custom_call.1} parent=1 // loop_body
      %s22 = ssub.s32 %s17, 1
      %s23 = ssub.s32 %s17, 2
      %s30 = sadd.s32 1, %s25
      %p31 = scmp.ge.s32.totalorder %s30, 1
      %s32 = scalar_select %p31, 0, %s30
      %s33 = sadd.s32 1, %s24
      %s34 = scalar_select %p31, %s33, %s24
      %p35 = scmp.ge.s32.totalorder %s34, 2
      %s36 = scalar_select %p35, 0, %s34
      %s37 = ssub.s32 %s24, %s36
      %s38 = ssub.s32 %s25, %s32
      %s39 = sor.u32 %s37, %s38
      %p40 = scmp.eq.s32.totalorder %s39, 0
      %s42 = sadd.s32 %s41, 1
      %s43 = scalar_select %p40, %s41, %s42
      %p46 = pneg %p40
      %p47 = scmp.eq.s32.totalorder %s17, 1
      %p48 = por %p46, %p47
      %p49 = scmp.ne.s32.totalorder %s41, %s44
      %p50 = scmp.eq.s32.totalorder %s17, 0
      %p51 = por %p49, %p50
      %p52 = scmp.ne.s32.totalorder %s41, %s44
      %p53 = scmp.eq.s32.totalorder %s22, 1
      %p54 = por %p52, %p53
      %p55 = scmp.ne.s32.totalorder %s44, %s45
      %p56 = scmp.eq.s32.totalorder %s22, 0
      %p57 = por %p55, %p56
      %p58 = scmp.ne.s32.totalorder %s44, %s45
      %p59 = scmp.eq.s32.totalorder %s23, 1
      %p60 = por %p58, %p59
      %p62 = scmp.ne.s32.totalorder %s45, %s61
      %p63 = scmp.eq.s32.totalorder %s23, 0
      %p64 = por %p62, %p63
      %s65 = ssub.s32 %s24, %s36
      %s66 = ssub.s32 %s25, %s32
      %s67 = sor.u32 %s65, %s66
      %p68 = scmp.eq.s32.totalorder %s67, 0
      %s70 = sadd.s32 %s69, 1
      %s71 = scalar_select %p68, %s69, %s70
      %p74 = pneg %p68
      %p75 = scmp.eq.s32.totalorder %s17, 1
      %p76 = por %p74, %p75
      %p77 = scmp.ne.s32.totalorder %s69, %s72
      %p78 = scmp.eq.s32.totalorder %s17, 0
      %p79 = por %p77, %p78
      %p80 = scmp.ne.s32.totalorder %s69, %s72
      %p81 = scmp.eq.s32.totalorder %s22, 1
      %p82 = por %p80, %p81
      %p83 = scmp.ne.s32.totalorder %s72, %s73
      %p84 = scmp.eq.s32.totalorder %s22, 0
      %p85 = por %p83, %p84
      %p86 = scmp.ne.s32.totalorder %s72, %s73
      %p87 = scmp.eq.s32.totalorder %s23, 1
      %p88 = por %p86, %p87
      %p90 = scmp.ne.s32.totalorder %s73, %s89
      %p91 = scmp.eq.s32.totalorder %s23, 0
      %p92 = por %p90, %p91
      %s94 = sadd.s32 %s93, 1
      %p97 = scmp.eq.s32.totalorder %s17, 1
      %p98 = scmp.ne.s32.totalorder %s93, %s95
      %p99 = scmp.eq.s32.totalorder %s17, 0
      %p100 = por %p98, %p99
      %p101 = scmp.ne.s32.totalorder %s93, %s95
      %p102 = scmp.eq.s32.totalorder %s22, 1
      %p103 = por %p101, %p102
      %p104 = scmp.ne.s32.totalorder %s95, %s96
      %p105 = scmp.eq.s32.totalorder %s22, 0
      %p106 = por %p104, %p105
      %p107 = scmp.ne.s32.totalorder %s95, %s96
      %p108 = scmp.eq.s32.totalorder %s23, 1
      %p109 = por %p107, %p108
      %p111 = scmp.ne.s32.totalorder %s96, %s110
      %p112 = scmp.eq.s32.totalorder %s23, 0
      %p113 = por %p111, %p112
      %s115 = sadd.s32 %s114, 1
      %p118 = scmp.eq.s32.totalorder %s17, 1
      %p119 = scmp.ne.s32.totalorder %s114, %s116
      %p120 = scmp.eq.s32.totalorder %s17, 0
      %p121 = por %p119, %p120
      %p122 = scmp.ne.s32.totalorder %s114, %s116
      %p123 = scmp.eq.s32.totalorder %s22, 1
      %p124 = por %p122, %p123
      %p125 = scmp.ne.s32.totalorder %s116, %s117
      %p126 = scmp.eq.s32.totalorder %s22, 0
      %p127 = por %p125, %p126
      %p128 = scmp.ne.s32.totalorder %s116, %s117
      %p129 = scmp.eq.s32.totalorder %s23, 1
      %p130 = por %p128, %p129
      %p132 = scmp.ne.s32.totalorder %s117, %s131
      %p133 = scmp.eq.s32.totalorder %s23, 0
      %p134 = por %p132, %p133
      %s136 = sadd.s32 %s135, 1
      %p139 = scmp.eq.s32.totalorder %s17, 1
      %p140 = scmp.ne.s32.totalorder %s135, %s137
      %p141 = scmp.eq.s32.totalorder %s17, 0
      %p142 = por %p140, %p141
      %p143 = scmp.ne.s32.totalorder %s135, %s137
      %p144 = scmp.eq.s32.totalorder %s22, 1
      %p145 = por %p143, %p144
      %p146 = scmp.ne.s32.totalorder %s137, %s138
      %p147 = scmp.eq.s32.totalorder %s22, 0
      %p148 = por %p146, %p147
      %p149 = scmp.ne.s32.totalorder %s137, %s138
      %p150 = scmp.eq.s32.totalorder %s23, 1
      %p151 = por %p149, %p150
      %p153 = scmp.ne.s32.totalorder %s138, %s152
      %p154 = scmp.eq.s32.totalorder %s23, 0
      %p155 = por %p153, %p154
      %s157 = sadd.s32 %s156, 1
      %p160 = scmp.eq.s32.totalorder %s17, 1
      %p161 = scmp.ne.s32.totalorder %s156, %s158
      %p162 = scmp.eq.s32.totalorder %s17, 0
      %p163 = por %p161, %p162
      %p164 = scmp.ne.s32.totalorder %s156, %s158
      %p165 = scmp.eq.s32.totalorder %s22, 1
      %p166 = por %p164, %p165
      %p167 = scmp.ne.s32.totalorder %s158, %s159
      %p168 = scmp.eq.s32.totalorder %s22, 0
      %p169 = por %p167, %p168
      %p170 = scmp.ne.s32.totalorder %s158, %s159
      %p171 = scmp.eq.s32.totalorder %s23, 1
      %p172 = por %p170, %p171
      %p174 = scmp.ne.s32.totalorder %s159, %s173
      %p175 = scmp.eq.s32.totalorder %s23, 0
      %p176 = por %p174, %p175
      %s178 = sadd.s32 %s177, 1
      %p181 = scmp.eq.s32.totalorder %s17, 1
      %p182 = scmp.ne.s32.totalorder %s177, %s179
      %p183 = scmp.eq.s32.totalorder %s17, 0
      %p184 = por %p182, %p183
      %p185 = scmp.ne.s32.totalorder %s177, %s179
      %p186 = scmp.eq.s32.totalorder %s22, 1
      %p187 = por %p185, %p186
      %p188 = scmp.ne.s32.totalorder %s179, %s180
      %p189 = scmp.eq.s32.totalorder %s22, 0
      %p190 = por %p188, %p189
      %p191 = scmp.ne.s32.totalorder %s179, %s180
      %p192 = scmp.eq.s32.totalorder %s23, 1
      %p193 = por %p191, %p192
      %p195 = scmp.ne.s32.totalorder %s180, %s194
      %p196 = scmp.eq.s32.totalorder %s23, 0
      %p197 = por %p195, %p196
      %s198 = ssub.s32 %s24, %s36
      %s199 = ssub.s32 %s25, %s32
      %s200 = sor.u32 %s198, %s199
      %p201 = scmp.eq.s32.totalorder %s200, 0
      %s203 = sadd.s32 %s202, 1
      %s204 = scalar_select %p201, %s202, %s203
      %p207 = pneg %p201
      %p208 = scmp.eq.s32.totalorder %s17, 1
      %p209 = por %p207, %p208
      %p210 = scmp.ne.s32.totalorder %s202, %s205
      %p211 = scmp.eq.s32.totalorder %s17, 0
      %p212 = por %p210, %p211
      %p213 = scmp.ne.s32.totalorder %s202, %s205
      %p214 = scmp.eq.s32.totalorder %s22, 1
      %p215 = por %p213, %p214
      %p216 = scmp.ne.s32.totalorder %s205, %s206
      %p217 = scmp.eq.s32.totalorder %s22, 0
      %p218 = por %p216, %p217
      %p219 = scmp.ne.s32.totalorder %s205, %s206
      %p220 = scmp.eq.s32.totalorder %s23, 1
      %p221 = por %p219, %p220
      %p223 = scmp.ne.s32.totalorder %s206, %s222
      %p224 = scmp.eq.s32.totalorder %s23, 0
      %p225 = por %p223, %p224
      %p226 = scmp.le.s32.totalorder 1, %s17
      %p227 = scmp.lt.s32.totalorder %s17, 3
      %p228 = pnand %p226, %p227
      %p229 = pneg %p228
      // Predicated region
      $region9: #{tpu_custom_call.1} parent=5 // pred_check
        _
      $region10: #{tpu_custom_call.1} parent=5 // pred_check_branch
        %231 = sbr.rel (%p228) target = $region12
      $region11: #{tpu_custom_call.1} parent=5 // pred_region
        %s232 = ssub.s32 %s17, 1
        // Predicated region
        $region13: #{tpu_custom_call.1} parent=11 // pred_check
          %p233 = pneg %p106
        $region14: #{tpu_custom_call.1} parent=11 // pred_check_branch
          %235 = sbr.rel (%p233) target = $region16
        $region15: #{tpu_custom_call.1} parent=11 // pred_region
          _
        $region16: #{tpu_custom_call.1} parent=11 // pred_fallthru
          _
        // Predicated region
        $region17: #{tpu_custom_call.1} parent=11 // pred_check
          %p236 = pneg %p127
        $region18: #{tpu_custom_call.1} parent=11 // pred_check_branch
          %238 = sbr.rel (%p236) target = $region20
        $region19: #{tpu_custom_call.1} parent=11 // pred_region
          _
        $region20: #{tpu_custom_call.1} parent=11 // pred_fallthru
          _
        // Predicated region
        $region21: #{tpu_custom_call.1} parent=11 // pred_check
          %p239 = pneg %p148
        $region22: #{tpu_custom_call.1} parent=11 // pred_check_branch
          %241 = sbr.rel (%p239) target = $region24
        $region23: #{tpu_custom_call.1} parent=11 // pred_region
          _
        $region24: #{tpu_custom_call.1} parent=11 // pred_fallthru
          _
        // Predicated region
        $region25: #{tpu_custom_call.1} parent=11 // pred_check
          %p242 = pneg %p169
        $region26: #{tpu_custom_call.1} parent=11 // pred_check_branch
          %244 = sbr.rel (%p242) target = $region28
        $region27: #{tpu_custom_call.1} parent=11 // pred_region
          _
        $region28: #{tpu_custom_call.1} parent=11 // pred_fallthru
          _
        // Predicated region
        $region29: #{tpu_custom_call.1} parent=11 // pred_check
          %p245 = pneg %p190
        $region30: #{tpu_custom_call.1} parent=11 // pred_check_branch
          %247 = sbr.rel (%p245) target = $region32
        $region31: #{tpu_custom_call.1} parent=11 // pred_region
          _
        $region32: #{tpu_custom_call.1} parent=11 // pred_fallthru
          _
      $region12: #{tpu_custom_call.1} parent=5 // pred_fallthru
        _
      %p248 = scmp.lt.s32.totalorder %s17, 2
      // Predicated region
      $region33: #{tpu_custom_call.1} parent=5 // pred_check
        %p249 = pneg %p248
      $region34: #{tpu_custom_call.1} parent=5 // pred_check_branch
        %251 = sbr.rel (%p249) target = $region36
      $region35: #{tpu_custom_call.1} parent=5 // pred_region
        // Predicated region
        $region37: #{tpu_custom_call.1} parent=35 // pred_check
          %p252 = pneg %p51
        $region38: #{tpu_custom_call.1} parent=35 // pred_check_branch
          %254 = sbr.rel (%p252) target = $region40
        $region39: #{tpu_custom_call.1} parent=35 // pred_region
          %s255 = smul.u32 2, %s25
          %p256 = scmp.lt.s32.totalorder %s24, 1
          %s257 = scalar_select %p256, %s24, 1
          %p258 = scmp.lt.s32.totalorder %s255, 1
          %s259 = scalar_select %p258, %s255, 1
          %s260 = smul.addr %s257, 2
          %s261 = sadd.s32 %s259, %s260
          %s262 = smul.addr %s261, 8
          %s263 = scalar_lea.vmem %s0, %s262
          %s264 = smul.u32 2, %s25
        $region40: #{tpu_custom_call.1} parent=35 // pred_fallthru
          _
        // Predicated region
        $region41: #{tpu_custom_call.1} parent=35 // pred_check
          %p265 = pneg %p79
        $region42: #{tpu_custom_call.1} parent=35 // pred_check_branch
          %267 = sbr.rel (%p265) target = $region44
        $region43: #{tpu_custom_call.1} parent=35 // pred_region
          %s268 = smul.u32 2, %s25
          %p269 = scmp.lt.s32.totalorder %s24, 1
          %s270 = scalar_select %p269, %s24, 1
          %p271 = scmp.lt.s32.totalorder %s268, 1
          %s272 = scalar_select %p271, %s268, 1
          %s273 = smul.addr %s270, 2
          %s274 = sadd.s32 %s272, %s273
          %s275 = smul.addr %s274, 4
          %s276 = scalar_lea.vmem %s1, %s275
          %s277 = smul.u32 2, %s25
        $region44: #{tpu_custom_call.1} parent=35 // pred_fallthru
          _
      $region36: #{tpu_custom_call.1} parent=5 // pred_fallthru
        _
      %p278 = scmp.le.s32.totalorder 1, %s17
      %p279 = scmp.lt.s32.totalorder %s17, 3
      %p280 = pnand %p278, %p279
      %p281 = pneg %p280
      // Predicated region
      $region45: #{tpu_custom_call.1} parent=5 // pred_check
        _
      $region46: #{tpu_custom_call.1} parent=5 // pred_check_branch
        %283 = sbr.rel (%p280) target = $region48
      $region47: #{tpu_custom_call.1} parent=5 // pred_region
        %s284 = ssub.s32 %s17, 1
        %s285 = smul.u32 2, %s27
        %p286 = scmp.lt.s32.totalorder %s26, 1
        %s287 = scalar_select %p286, %s26, 1
        %p288 = scmp.lt.s32.totalorder %s285, 1
        %s289 = scalar_select %p288, %s285, 1
        %s290 = smul.addr %s287, 2
        %s291 = sadd.s32 %s289, %s290
        %s292 = smul.addr %s291, 8
        %s293 = scalar_lea.vmem %s0, %s292
        %p294 = pneg %p57
        %p295 = pneg %p54
        %s296 = smul.u32 2, %s27
        %p297 = scmp.lt.s32.totalorder %s26, 1
        %s298 = scalar_select %p297, %s26, 1
        %p299 = scmp.lt.s32.totalorder %s296, 1
        %s300 = scalar_select %p299, %s296, 1
        %s301 = smul.addr %s298, 2
        %s302 = sadd.s32 %s300, %s301
        %s303 = smul.addr %s302, 4
        %s304 = scalar_lea.vmem %s1, %s303
        %p305 = pneg %p85
        %p306 = pneg %p82
        %p307 = pneg %p106
        %p308 = pneg %p103
        %p309 = pneg %p127
        %p310 = pneg %p124
        %p311 = pneg %p148
        %p312 = pneg %p145
        %p313 = pneg %p169
        %p314 = pneg %p166
        %p315 = pneg %p190
        %p316 = pneg %p187
        %p317 = pneg %p218
        %p318 = pneg %p215
        %s319 = sand.u32 %s205, 1
        %s320 = scalar_lea.sflag [#allocation4], %s319
        %s321 = sand.u32 %s205, 1
        %s322 = smul.addr %s321, 8
        %s323 = scalar_lea.vmem [#allocation3], %s322
        %s324 = smul.u32 2, %s27
        %p325 = scmp.lt.s32.totalorder %s26, 1
        %s326 = scalar_select %p325, %s26, 1
        %p327 = scmp.lt.s32.totalorder %s324, 1
        %s328 = scalar_select %p327, %s324, 1
        %s329 = smul.addr %s326, 2
        %s330 = sadd.s32 %s328, %s329
        %s331 = smul.addr %s330, 8
        %s332 = scalar_lea.vmem %s0, %s331
        %s333 = smul.u32 2, %s27
        %s334 = smul.u32 2, %s27
        %p335 = scmp.lt.s32.totalorder %s26, 1
        %s336 = scalar_select %p335, %s26, 1
        %p337 = scmp.lt.s32.totalorder %s334, 1
        %s338 = scalar_select %p337, %s334, 1
        %s339 = smul.addr %s336, 2
        %s340 = sadd.s32 %s338, %s339
        %s341 = smul.addr %s340, 4
        %s342 = scalar_lea.vmem %s1, %s341
        %s343 = smul.u32 2, %s27
        %s344 = smul.u32 2, %s27
        %v345 = vld [vmem:[%s2] sm:$0xff]
        %v346 = vld [vmem:[%s2 + $0x8] sm:$0xff]
        %v347 = vld [vmem:[%s332] sm:$0xff]
        %v348 = vld [vmem:[%s332 + $0x8] sm:$0xff]
        %v349 = vld [vmem:[%s3] sm:$0xff]
        %v350 = vld [vmem:[%s3 + $0x8] sm:$0xff]
        %v351 = vld [vmem:[%s342] sm:$0xff]
        %v353 = vcombine.high %v351, %v351
        %vm354 = vcmask 31744
        %v356 = vsel %vm354, %v349, 0
        %v359 = vsel %vm354, %v350, 0
        %vm361 = vcmask 1043456
        %v362 = vsel %vm361, %v351, 0
        %v364 = vsel %vm361, %v353, 0
        %366 = vmatprep.subr.mxu0 %v364
        %367 = vmatpush1.msra.mxu0 %v362
        %368 = vmatprep.subr.mxu0 0.0
        %369 = vmatpush1.msra.mxu0 0.0
        %370 = vmatprep.subr.mxu0 0.0
        %371 = vmatpush1.msra.mxu0 0.0
        %372 = vmatprep.subr.mxu0 0.0
        %373 = vmatpush1.msra.mxu0 0.0
        %374 = vmatprep.subr.mxu0 0.0
        %375 = vmatpush1.msra.mxu0 0.0
        %376 = vmatprep.subr.mxu0 0.0
        %377 = vmatpush1.msra.mxu0 0.0
        %378 = vmatprep.subr.mxu0 0.0
        %379 = vmatpush1.msra.mxu0 0.0
        %380 = vmatprep.subr.mxu0 0.0
        %381 = vmatpush1.msra.mxu0 0.0
        %382 = vmatprep.subr.mxu0 0.0
        %383 = vmatpush1.msra.mxu0 0.0
        %384 = vmatprep.subr.mxu0 0.0
        %385 = vmatpush1.msra.mxu0 0.0
        %386 = vmatprep.subr.mxu0 0.0
        %387 = vmatpush1.msra.mxu0 0.0
        %388 = vmatprep.subr.mxu0 0.0
        %389 = vmatpush1.msra.mxu0 0.0
        %390 = vmatprep.subr.mxu0 0.0
        %391 = vmatpush1.msra.mxu0 0.0
        %392 = vmatprep.subr.mxu0 0.0
        %393 = vmatpush1.msra.mxu0 0.0
        %394 = vmatprep.subr.mxu0 0.0
        %395 = vmatpush1.msra.mxu0 0.0
        %396 = vmatprep.subr.mxu0 0.0
        %397 = vmatpush1.msra.mxu0 0.0
        %398 = vmatprep.subr.mxu0 0.0
        %399 = vmatpush1.msra.mxu0 0.0
        %400 = vmatprep.subr.mxu0 0.0
        %401 = vmatpush1.msra.mxu0 0.0
        %402 = vmatprep.subr.mxu0 0.0
        %403 = vmatpush1.msra.mxu0 0.0
        %404 = vmatprep.subr.mxu0 0.0
        %405 = vmatpush1.msra.mxu0 0.0
        %406 = vmatprep.subr.mxu0 0.0
        %407 = vmatpush1.msra.mxu0 0.0
        %408 = vmatprep.subr.mxu0 0.0
        %409 = vmatpush1.msra.mxu0 0.0
        %410 = vmatprep.subr.mxu0 0.0
        %411 = vmatpush1.msra.mxu0 0.0
        %412 = vmatprep.subr.mxu0 0.0
        %413 = vmatpush1.msra.mxu0 0.0
        %414 = vmatprep.subr.mxu0 0.0
        %415 = vmatpush1.msra.mxu0 0.0
        %416 = vmatprep.subr.mxu0 0.0
        %417 = vmatpush1.msra.mxu0 0.0
        %418 = vmatprep.subr.mxu0 0.0
        %419 = vmatpush1.msra.mxu0 0.0
        %420 = vmatprep.subr.mxu0 0.0
        %421 = vmatpush1.msra.mxu0 0.0
        %422 = vmatprep.subr.mxu0 0.0
        %423 = vmatpush1.msra.mxu0 0.0
        %424 = vmatprep.subr.mxu0 0.0
        %425 = vmatpush1.msra.mxu0 0.0
        %426 = vmatprep.subr.mxu0 0.0
        %427 = vmatpush1.msra.mxu0 0.0
        %428 = vmatprep.subr.mxu0 0.0
        %429 = vmatpush1.msra.mxu0 0.0
        %430 = vmatprep.mubr.f32.mxu0 0.0
        %431 = vmatmul.mubr.f32.gmra.mrb[0].mxu0 %v356
        %v432 = vpop.f32.mrb[0].mxu0
        %v433 = vadd.f32 0.0, %v432
        %v434 = vpop.f32.mrb[0].mxu0
        %v435 = vadd.f32 0.0, %v434
        %436 = vmatprep.mubr.f32.mxu0 0.0
        %437 = vmatmul.mubr.f32.gmra.mrb[0].mxu0 %v359
        %v438 = vpop.f32.mrb[0].mxu0
        %v439 = vadd.f32 0.0, %v438
        %v440 = vpop.f32.mrb[0].mxu0
        %v441 = vadd.f32 0.0, %v440
        %442 = vdwg.mxu0
        %vm443 = vcmask 64512
        %v445 = vsel %vm443, %v345, 0
        %v448 = vsel %vm443, %v346, 0
        %450 = vmatprep.subr.mxu0 %v348
        %451 = vmatpush1.msra.mxu0 %v347
        %452 = vmatprep.subr.mxu0 0.0
        %453 = vmatpush1.msra.mxu0 0.0
        %454 = vmatprep.subr.mxu0 0.0
        %455 = vmatpush1.msra.mxu0 0.0
        %456 = vmatprep.subr.mxu0 0.0
        %457 = vmatpush1.msra.mxu0 0.0
        %458 = vmatprep.subr.mxu0 0.0
        %459 = vmatpush1.msra.mxu0 0.0
        %460 = vmatprep.subr.mxu0 0.0
        %461 = vmatpush1.msra.mxu0 0.0
        %462 = vmatprep.subr.mxu0 0.0
        %463 = vmatpush1.msra.mxu0 0.0
        %464 = vmatprep.subr.mxu0 0.0
        %465 = vmatpush1.msra.mxu0 0.0
        %466 = vmatprep.subr.mxu0 0.0
        %467 = vmatpush1.msra.mxu0 0.0
        %468 = vmatprep.subr.mxu0 0.0
        %469 = vmatpush1.msra.mxu0 0.0
        %470 = vmatprep.subr.mxu0 0.0
        %471 = vmatpush1.msra.mxu0 0.0
        %472 = vmatprep.subr.mxu0 0.0
        %473 = vmatpush1.msra.mxu0 0.0
        %474 = vmatprep.subr.mxu0 0.0
        %475 = vmatpush1.msra.mxu0 0.0
        %476 = vmatprep.subr.mxu0 0.0
        %477 = vmatpush1.msra.mxu0 0.0
        %478 = vmatprep.subr.mxu0 0.0
        %479 = vmatpush1.msra.mxu0 0.0
        %480 = vmatprep.subr.mxu0 0.0
        %481 = vmatpush1.msra.mxu0 0.0
        %482 = vmatprep.subr.mxu0 0.0
        %483 = vmatpush1.msra.mxu0 0.0
        %484 = vmatprep.subr.mxu0 0.0
        %485 = vmatpush1.msra.mxu0 0.0
        %486 = vmatprep.subr.mxu0 0.0
        %487 = vmatpush1.msra.mxu0 0.0
        %488 = vmatprep.subr.mxu0 0.0
        %489 = vmatpush1.msra.mxu0 0.0
        %490 = vmatprep.subr.mxu0 0.0
        %491 = vmatpush1.msra.mxu0 0.0
        %492 = vmatprep.subr.mxu0 0.0
        %493 = vmatpush1.msra.mxu0 0.0
        %494 = vmatprep.subr.mxu0 0.0
        %495 = vmatpush1.msra.mxu0 0.0
        %496 = vmatprep.subr.mxu0 0.0
        %497 = vmatpush1.msra.mxu0 0.0
        %498 = vmatprep.subr.mxu0 0.0
        %499 = vmatpush1.msra.mxu0 0.0
        %500 = vmatprep.subr.mxu0 0.0
        %501 = vmatpush1.msra.mxu0 0.0
        %502 = vmatprep.subr.mxu0 0.0
        %503 = vmatpush1.msra.mxu0 0.0
        %504 = vmatprep.subr.mxu0 0.0
        %505 = vmatpush1.msra.mxu0 0.0
        %506 = vmatprep.subr.mxu0 0.0
        %507 = vmatpush1.msra.mxu0 0.0
        %508 = vmatprep.subr.mxu0 0.0
        %509 = vmatpush1.msra.mxu0 0.0
        %510 = vmatprep.subr.mxu0 0.0
        %511 = vmatpush1.msra.mxu0 0.0
        %512 = vmatprep.subr.mxu0 0.0
        %513 = vmatpush1.msra.mxu0 0.0
        %514 = vmatprep.mubr.f32.mxu0 0.0
        %515 = vmatmul.mubr.f32.gmra.mrb[0].mxu0 %v445
        %v516 = vpop.f32.mrb[0].mxu0
        %v517 = vadd.f32 %v433, %v516
        %v518 = vpop.f32.mrb[0].mxu0
        %v519 = vadd.f32 %v435, %v518
        %520 = vmatprep.mubr.f32.mxu0 0.0
        %521 = vmatmul.mubr.f32.gmra.mrb[0].mxu0 %v448
        %v522 = vpop.f32.mrb[0].mxu0
        %v523 = vadd.f32 %v439, %v522
        %v524 = vpop.f32.mrb[0].mxu0
        %v525 = vadd.f32 %v441, %v524
        %526 = vdwg.mxu0
        %v527 = vld [vmem:[%s4] sm:$0xff]
        %v528 = vld [vmem:[%s4 + $0x8] sm:$0xff]
        %530 = vset.pattern.permute.xlu0 0
        %531 = vperm.xlu0 %530, %v527
        %v532 = vpop.permute.xlu0 %531
        %535 = vset.pattern.permute.xlu0 0
        %536 = vperm.xlu0 %535, %v528
        %v537 = vpop.permute.xlu0 %536
        %v539 = vadd.f32 %v517, %v532
        %v540 = vadd.f32 %v519, %v532
        %v541 = vadd.f32 %v523, %v537
        %v542 = vadd.f32 %v525, %v537
        %v543 = vmax.f32 %v539, 0.0
        %v544 = vmax.f32 %v540, 0.0
        %v545 = vmax.f32 %v541, 0.0
        %v546 = vmax.f32 %v542, 0.0
        %v547 = vld [vmem:[%s5] sm:$0xff]
        %v548 = vld [vmem:[%s5 + $0x8] sm:$0xff]
        %550 = vset.pattern.permute.xlu0 0
        %551 = vperm.xlu0 %550, %v547
        %v552 = vpop.permute.xlu0 %551
        %555 = vset.pattern.permute.xlu0 0
        %556 = vperm.xlu0 %555, %v548
        %v557 = vpop.permute.xlu0 %556
        %v559 = vmul.f32 %v543, %v552
        %v560 = vmul.f32 %v544, %v552
        %v561 = vmul.f32 %v545, %v557
        %v562 = vmul.f32 %v546, %v557
        %v563 = vadd.f32 %v559, %v561
        %v564 = vrot.slane %v563, 4
        %v565 = vadd.f32 %v563, %v564
        %v566 = vrot.slane %v565, 2
        %v567 = vadd.f32 %v565, %v566
        %v568 = vrot.slane %v567, 1
        %v569 = vadd.f32 %v567, %v568
        %v570 = vadd.f32 %v560, %v562
        %v571 = vrot.slane %v570, 4
        %v572 = vadd.f32 %v570, %v571
        %v573 = vrot.slane %v572, 2
        %v574 = vadd.f32 %v572, %v573
        %v575 = vrot.slane %v574, 1
        %v576 = vadd.f32 %v574, %v575
        %s577 = sld [smem:[#allocation2]]
        %v578 = vstv %s577
        %v579 = vadd.f32 %v569, %v578
        %v580 = vadd.f32 %v576, %v578
        %v581 = vxor.u32 %v579, 2147483648
        %v582 = vxor.u32 %v580, 2147483648
        %v583 = vmul.f32 %v581, 1.442695
        %v584 = vpow.pop %v583
        %v585 = vmul.f32 %v582, 1.442695
        %v586 = vpow.pop %v585
        %v587 = vadd.f32 %v584, 1.0
        %v588 = vadd.f32 %v586, 1.0
        %v589 = vrcp.pop %v587
        %v590 = vmul.f32 1.0, %v589
        %v591 = vrcp.pop %v588
        %v592 = vmul.f32 1.0, %v591
        %v595 = vcombine.low %v590, %v592
        %v597 = vmul.f32 %v351, %v595
        %598 = vst [vmem:[%s323] sm:$0xff] %v597
        %s599 = sand.u32 %s205, 1
        %s600 = scalar_lea.sflag [#allocation4], %s599
        %s601 = sand.u32 %s205, 1
        %s602 = smul.addr %s601, 8
        %s603 = scalar_lea.vmem [#allocation3], %s602
        // Predicated region
        $region49: #{tpu_custom_call.1} parent=47 // pred_check
          %p604 = pneg %p215
        $region50: #{tpu_custom_call.1} parent=47 // pred_check_branch
          %606 = sbr.rel (%p604) target = $region52
        $region51: #{tpu_custom_call.1} parent=47 // pred_region
          %s607 = smul.u32 2, %s27
          %s609 = ssub.s32 128, 128
          %610 = vsyncadd %s600, %s609
          %s611 = smul.addr %s26, 2
          %s612 = sadd.s32 %s607, %s611
          %s613 = smul.addr %s612, 64
          %s614 = scalar_lea.hbm %s7, %s613
          %s616 = sshll.u32 %s603, 4
          %s617 = int_to_ptr.vmem [resolvable:$true] %s616
          %619 = dma.vmem_to_hbm [thread:$0]  %s617, 128, %s614, %s600
        $region52: #{tpu_custom_call.1} parent=47 // pred_fallthru
          _
      $region48: #{tpu_custom_call.1} parent=5 // pred_fallthru
        _
      %p620 = scmp.le.s32.totalorder 2, %s17
      // Predicated region
      $region53: #{tpu_custom_call.1} parent=5 // pred_check
        %p621 = pneg %p620
      $region54: #{tpu_custom_call.1} parent=5 // pred_check_branch
        %623 = sbr.rel (%p621) target = $region56
      $region55: #{tpu_custom_call.1} parent=5 // pred_region
        %s624 = ssub.s32 %s17, 2
        // Predicated region
        $region57: #{tpu_custom_call.1} parent=55 // pred_check
          %p625 = pneg %p221
        $region58: #{tpu_custom_call.1} parent=55 // pred_check_branch
          %627 = sbr.rel (%p625) target = $region60
        $region59: #{tpu_custom_call.1} parent=55 // pred_region
          %s628 = sand.u32 %s206, 1
          %s629 = scalar_lea.sflag [#allocation4], %s628
          %s630 = sand.u32 %s206, 1
          %s631 = smul.addr %s630, 8
          %s632 = scalar_lea.vmem [#allocation3], %s631
          %633 = dma.done %s629, 128
        $region60: #{tpu_custom_call.1} parent=55 // pred_fallthru
          _
      $region56: #{tpu_custom_call.1} parent=5 // pred_fallthru
        _
    $region6: #{tpu_custom_call.1} parent=1 // loop_footer
      %s21 = sadd.s32 1, %s17
    $region7: #{tpu_custom_call.1} parent=1 // loop_footer_branch
      %16 = sbr.rel target = $region3
    $region8: #{tpu_custom_call.1} parent=1 // loop_exit
      _
    %634 = vsyncpa [#allocation4], 1
    %s635 = scalar_lea.sflag [#allocation4], 1
    %636 = vsyncpa %s635, 1

</llo_original>
